<compile_context>
chip_gen: v7x
topology: tpu7x:2x2x1
jax: 0.10.0
libtpu: 0.0.40
codegen_flags: <defaults>
</compile_context>

<pallas_src>
import jax
import jax.numpy as jnp
from jax.experimental import pallas as pl
from jax.experimental.pallas import tpu as pltpu


def _aq_kernel(params_ref, x_ref, o_ref):
    # params_ref: (3,) float32 in SMEM = [alpha, scale, inv_scale]
    # x_ref / o_ref: (tm, cols) tile in VMEM
    alpha = params_ref[0]
    scale = params_ref[1]
    inv_scale = params_ref[2]
    x = x_ref[...].astype(jnp.float32)
    clamped = jnp.where(x < alpha, x, alpha)            # matches torch.where (NaN -> alpha)
    q = jnp.round(clamped * scale) * inv_scale          # round-half-to-even
    o_ref[...] = q.astype(o_ref.dtype)


def _pick_tm(rows, row_bytes, block_bytes):
    """Pick a legal row tile (multiple of 8, or == rows) near block_bytes."""
    if rows * row_bytes <= block_bytes:
        if rows > 64:
            # Whole tensor fits one block; split ~in half so both v7x
            # TensorCores get a grid step.
            return ((rows + 15) // 16) * 8
        return rows
    return max(8, (block_bytes // row_bytes) // 8 * 8)


def aq_forward(x, alpha, abit, *, block_bytes=4 << 20, vmem_limit_bytes=48 << 20,
               donate_input=False):
    """AQ forward.  x: any-shape float array, alpha: (1,) float32 parameter."""
    orig_shape = x.shape
    total = int(x.size)
    itemsize = jnp.dtype(x.dtype).itemsize
    n_lv = float(2 ** abit - 1)

    # Precompute scalar params once (no per-step scalar divides in the kernel).
    a = alpha.reshape(-1)[:1].astype(jnp.float32)
    scale = n_lv / a
    inv_scale = 1.0 / scale
    params = jnp.concatenate([a, scale, inv_scale])      # (3,) float32 -> SMEM

    padded = False
    if total % 128 == 0:
        # Fast path: lane-dense slab, free reshape, no padding.
        lane = 128
        while lane < 4096 and total % (lane * 2) == 0 and total // (lane * 2) >= 8:
            lane *= 2
        rows, cols = total // lane, lane
        x2 = x.reshape(rows, cols)
    else:
        # Ragged path: collapse to (rows, trailing_dim); the last block dim
        # equals the full array dim so the BlockSpec is legal. No copies.
        cols = int(orig_shape[-1]) if x.ndim >= 1 else 1
        rows = total // cols
        row_bytes = cols * itemsize
        if rows * row_bytes <= block_bytes or (block_bytes // max(row_bytes, 1)) >= 8:
            x2 = x.reshape(rows, cols)
        else:
            # Pathological shape (huge non-128-divisible trailing dim): fall
            # back to pad + slice.  Costs extra HBM copies but is very rare.
            cols = 1024
            rows = (total + cols - 1) // cols
            pad = rows * cols - total
            x2 = jnp.pad(x.reshape(-1), (0, pad)).reshape(rows, cols)
            padded = True

    row_bytes = cols * itemsize
    tm = _pick_tm(rows, row_bytes, block_bytes)
    grid_n = (rows + tm - 1) // tm

    kwargs = {}
    if donate_input:
        # Alias the activation slab into the output (halves peak HBM footprint
        # when the caller no longer needs the raw activations).
        kwargs["input_output_aliases"] = {1: 0}

    out2 = pl.pallas_call(
        _aq_kernel,
        out_shape=jax.ShapeDtypeStruct((rows, cols), x.dtype),
        grid_spec=pltpu.PrefetchScalarGridSpec(
            num_scalar_prefetch=0,
            grid=(grid_n,),
            in_specs=[
                pl.BlockSpec(memory_space=pltpu.MemorySpace.SMEM),   # params (3,)
                pl.BlockSpec((tm, cols), lambda i: (i, 0)),           # x tile
            ],
            out_specs=pl.BlockSpec((tm, cols), lambda i: (i, 0)),
        ),
        compiler_params=pltpu.CompilerParams(
            dimension_semantics=("parallel",),
            vmem_limit_bytes=vmem_limit_bytes,
        ),
        cost_estimate=pl.CostEstimate(
            flops=4 * rows * cols,
            transcendentals=0,
            bytes_accessed=2 * rows * cols * itemsize,
        ),
        **kwargs,
    )(params, x2)

    if padded:
        return out2.reshape(-1)[:total].reshape(orig_shape)
    return out2.reshape(orig_shape)


def aq_reference(x, alpha, abit):
    """Pure-JAX reference matching the PyTorch module exactly."""
    a = alpha[0]
    clamped = jnp.where(x < a, x, a)
    scale = (2 ** abit - 1) / a
    return jnp.round(clamped * scale) / scale


# TODO(synk): RoundQuant.backward (straight-through estimator) is not part of
# the forward pass and is not implemented here.

if __name__ == "__main__":
    key = jax.random.PRNGKey(0)

    # Module config: AQ(abit=4, num_features=4, alpha_init=2.0)
    abit = 4
    alpha = jnp.array([2.0], dtype=jnp.float32)   # nn.Parameter([alpha_init])

    # Main case: N=2, C=4, H=W=16 — lane-dense fast path, no padding.
    x = jax.random.normal(key, (2, 4, 16, 16), dtype=jnp.float32) * 3.0
    out = jax.block_until_ready(aq_forward(x, alpha, abit))
    ref = aq_reference(x, alpha, abit)
    assert out.shape == x.shape and out.dtype == x.dtype
    assert jnp.allclose(out, ref, atol=1e-5, rtol=1e-5), "mismatch vs reference"

    # Ragged case (total not a multiple of 128): trailing-dim path, no copies.
    k1, k2 = jax.random.split(key)
    x2 = jax.random.normal(k1, (2, 3, 17, 19), dtype=jnp.float32) * 3.0
    out2 = jax.block_until_ready(aq_forward(x2, alpha, abit))
    assert out2.shape == x2.shape
    assert jnp.allclose(out2, aq_reference(x2, alpha, abit), atol=1e-5, rtol=1e-5), \
        "mismatch (ragged case)"

    # Case exercising a multi-step grid with a partial final block
    # (the >64-row split used so v7x can run on both TensorCores).
    x3 = jax.random.normal(k2, (2, 4, 80, 104), dtype=jnp.float32) * 3.0
    out3 = jax.block_until_ready(aq_forward(x3, alpha, abit))
    assert out3.shape == x3.shape
    assert jnp.allclose(out3, aq_reference(x3, alpha, abit), atol=1e-5, rtol=1e-5), \
        "mismatch (multi-block case)"

    print("KERNEL_OK")
</pallas_src>

<mosaic_0001>
module attributes {stable_mosaic.version = 11 : i64} {
  func.func @_aq_kernel(%arg0: i32, %arg1: memref<3xf32, #tpu.memory_space<smem>>, %arg2: memref<8x256xf32, #tpu.memory_space<vmem>>, %arg3: memref<8x256xf32, #tpu.memory_space<vmem>>) attributes {dimension_semantics = [#tpu.dimension_semantics<parallel>], iteration_bounds = array<i64: 1>, scalar_prefetch = 0 : i64, scratch_operands = 0 : i64, tpu.core_type = #tpu.core_type<tc>, window_params = [{transform_indices = @transform_0, window_bounds = array<i64: 3>}, {transform_indices = @transform_1, window_bounds = array<i64: 8, 256>}, {transform_indices = @transform_2, window_bounds = array<i64: 8, 256>}]} {
    %c0 = arith.constant 0 : index
    %0 = memref.load %arg1[%c0] : memref<3xf32, #tpu.memory_space<smem>>
    %c1 = arith.constant 1 : index
    %1 = memref.load %arg1[%c1] : memref<3xf32, #tpu.memory_space<smem>>
    %c2 = arith.constant 2 : index
    %2 = memref.load %arg1[%c2] : memref<3xf32, #tpu.memory_space<smem>>
    %c0_0 = arith.constant 0 : index
    %c0_1 = arith.constant 0 : index
    %3 = vector.load %arg2[%c0_0, %c0_1] : memref<8x256xf32, #tpu.memory_space<vmem>>, vector<8x256xf32>
    %4 = vector.broadcast %0 : f32 to vector<8x256xf32>
    %5 = arith.cmpf olt, %3, %4 : vector<8x256xf32>
    %6 = vector.broadcast %0 : f32 to vector<8x256xf32>
    %7 = arith.select %5, %3, %6 : vector<8x256xi1>, vector<8x256xf32>
    %8 = vector.broadcast %1 : f32 to vector<8x256xf32>
    %9 = arith.mulf %7, %8 : vector<8x256xf32>
    %10 = math.roundeven %9 : vector<8x256xf32>
    %11 = vector.broadcast %2 : f32 to vector<8x256xf32>
    %12 = arith.mulf %10, %11 : vector<8x256xf32>
    %c0_2 = arith.constant 0 : index
    %c0_3 = arith.constant 0 : index
    %13 = vector.load %arg3[%c0_2, %c0_3] : memref<8x256xf32, #tpu.memory_space<vmem>>, vector<8x256xf32>
    tpu.vector_store %arg3[%c0_2, %c0_3], %12 {strides = array<i32>} : memref<8x256xf32, #tpu.memory_space<vmem>>, vector<8x256xf32>,
    return
  }
  func.func @transform_0(%arg0: i32) -> i32 {
    %c0_i32 = arith.constant 0 : i32
    %c0_i32_0 = arith.constant 0 : i32
    return %c0_i32 : i32
  }
  func.func @transform_1(%arg0: i32) -> (i32, i32) {
    %c0_i32 = arith.constant 0 : i32
    %c0_i32_0 = arith.constant 0 : i32
    return %arg0, %c0_i32 : i32, i32
  }
  func.func @transform_2(%arg0: i32) -> (i32, i32) {
    %c0_i32 = arith.constant 0 : i32
    %c0_i32_0 = arith.constant 0 : i32
    return %arg0, %c0_i32 : i32, i32
  }
}

</mosaic_0001>

<llo_original>
// kernel: tpu_custom_call.1
$region0: #{tpu_custom_call.1}
  #allocation0 [shape = 'u32[]', space=smem, size = 0x4, offset = 0x4, fixed_abs, tag = 'smem constant byte address 0x4 - core index']
  #allocation1 [shape = 'u32[144,128]{1,0:T(1,128)}', space=vmem, size = 0x12000, scoped, tag = 'internal scratch']
  %s0 = inlined_call_operand.hbm [shape: f32[3], index: 0, kind: input, shape index: {}]
  %s1 = inlined_call_operand.hbm [shape: f32[8,256], index: 1, kind: input, shape index: {}]
  %s2 = inlined_call_operand.hbm [shape: f32[8,256], index: 2, kind: output, shape index: {}]
  %s3 = sld [smem:[#allocation0]]
  $region26: #{tpu_custom_call.1} parent=0
    _
  %s5 = ssub.s32 1, %s3
  %s6 = scalar_select 0, %s5, %s3
  $region1: #{tpu_custom_call.1} parent=0
    #allocation2 [shape = 'u8[512]{0}', space=smem, size = 0x200, scoped, tag = 'input window, operand 0, single buffered']
    #allocation3 [shape = 's32[1]{0}', space=sflag, size = 0x4, scoped, tag = 'scoped memory for tpu_custom_call.1']
    #allocation4 [shape = 's32[1]{0}', space=sflag, size = 0x4, scoped, tag = 'scoped memory for tpu_custom_call.1']
    #allocation5 [shape = 's32[1]{0}', space=sflag, size = 0x4, scoped, tag = 'scoped memory for tpu_custom_call.1']
    #allocation6 [shape = 'u8[8192]{0}', space=vmem, size = 0x2000, scoped, tag = 'input window, operand 1, single buffered']
    #allocation7 [shape = 'u8[8192]{0}', space=vmem, size = 0x2000, scoped, tag = 'output window, operand 0, single buffered']
    %7 = vsyncpa [#allocation5], 0
    %8 = vsyncpa [#allocation3], 0
    %9 = vsyncpa [#allocation4], 0
    // Predicated region
    $region2: #{tpu_custom_call.1} parent=1 // pred_check
      _
    $region3: #{tpu_custom_call.1} parent=1 // pred_check_branch
      %11 = sbr.rel (0) target = $region5
    $region4: #{tpu_custom_call.1} parent=1 // pred_region
      %s13 = ssub.s32 16, 16
      %14 = vsyncadd [#allocation5], %s13
      %17 = dma.hbm_to_smem %s0, 16, [#allocation2], [#allocation5]
    $region5: #{tpu_custom_call.1} parent=1 // pred_fallthru
      _
    // Predicated region
    $region6: #{tpu_custom_call.1} parent=1 // pred_check
      _
    $region7: #{tpu_custom_call.1} parent=1 // pred_check_branch
      %19 = sbr.rel (0) target = $region9
    $region8: #{tpu_custom_call.1} parent=1 // pred_region
      %s21 = ssub.s32 256, 256
      %22 = vsyncadd [#allocation3], %s21
      %s24 = sshll.u32 [#allocation6], 4
      %s25 = int_to_ptr.vmem [resolvable:$true] %s24
      %27 = dma.hbm_to_vmem [thread:$0]  %s1, 256, %s25, [#allocation3]
    $region9: #{tpu_custom_call.1} parent=1 // pred_fallthru
      _
    // Predicated region
    $region10: #{tpu_custom_call.1} parent=1 // pred_check
      _
    $region11: #{tpu_custom_call.1} parent=1 // pred_check_branch
      %29 = sbr.rel (0) target = $region13
    $region12: #{tpu_custom_call.1} parent=1 // pred_region
      %30 = dma.done [#allocation5], 16
    $region13: #{tpu_custom_call.1} parent=1 // pred_fallthru
      _
    // Predicated region
    $region14: #{tpu_custom_call.1} parent=1 // pred_check
      _
    $region15: #{tpu_custom_call.1} parent=1 // pred_check_branch
      %32 = sbr.rel (0) target = $region17
    $region16: #{tpu_custom_call.1} parent=1 // pred_region
      %33 = dma.done [#allocation3], 256
    $region17: #{tpu_custom_call.1} parent=1 // pred_fallthru
      _
    %34 = sfence
    %s35 = sld [smem:[#allocation2]]
    %s36 = sld [smem:[#allocation2 + $0x1]]
    %s37 = sld [smem:[#allocation2 + $0x2]]
    %v38 = vld [vmem:[#allocation6] sm:$0xff]
    %v39 = vld [vmem:[#allocation6 + $0x8] sm:$0xff]
    %v40 = vstv %s35
    %vm41 = vcmp.lt.f32.partialorder %v38, %v40
    %vm42 = vcmp.lt.f32.partialorder %v39, %v40
    %v43 = vsel %vm41, %v38, %v40
    %v44 = vsel %vm42, %v39, %v40
    %v45 = vstv %s36
    %v46 = vmul.f32 %v43, %v45
    %v47 = vmul.f32 %v44, %v45
    %v48 = vround.ne.pseudo %v46
    %v49 = vround.ne.pseudo %v47
    %v50 = vstv %s37
    %v51 = vmul.f32 %v48, %v50
    %v52 = vmul.f32 %v49, %v50
    %53 = vst [vmem:[#allocation7] sm:$0xff] %v51
    %54 = vst [vmem:[#allocation7 + $0x8] sm:$0xff] %v52
    // Predicated region
    $region18: #{tpu_custom_call.1} parent=1 // pred_check
      _
    $region19: #{tpu_custom_call.1} parent=1 // pred_check_branch
      %56 = sbr.rel (0) target = $region21
    $region20: #{tpu_custom_call.1} parent=1 // pred_region
      %s58 = ssub.s32 256, 256
      %59 = vsyncadd [#allocation4], %s58
      %s61 = sshll.u32 [#allocation7], 4
      %s62 = int_to_ptr.vmem [resolvable:$true] %s61
      %64 = dma.vmem_to_hbm [thread:$0]  %s62, 256, %s2, [#allocation4]
    $region21: #{tpu_custom_call.1} parent=1 // pred_fallthru
      _
    // Predicated region
    $region22: #{tpu_custom_call.1} parent=1 // pred_check
      _
    $region23: #{tpu_custom_call.1} parent=1 // pred_check_branch
      %66 = sbr.rel (0) target = $region25
    $region24: #{tpu_custom_call.1} parent=1 // pred_region
      %67 = dma.done [#allocation4], 256
    $region25: #{tpu_custom_call.1} parent=1 // pred_fallthru
      _
    %68 = vsyncpa [#allocation3], 1
    %69 = vsyncpa [#allocation4], 1
    %70 = vsyncpa [#allocation5], 1

</llo_original>
